<compile_context>
chip_gen: v7x
topology: tpu7x:2x2x1
jax: 0.10.0
libtpu: 0.0.40
codegen_flags: <defaults>
</compile_context>

<pallas_src>
import functools
import math

import jax
import jax.numpy as jnp
from jax.experimental import pallas as pl
from jax.experimental.pallas import tpu as pltpu


_VMEM_LIMIT = 48 * 1024 * 1024   # <= v7x physical 64 MiB, raises v5e/v6e scoped default


# ----------------------------- tiling helper -------------------------------

def _pick_tile(dim, preferred, align):
    """Largest multiple of `align` that divides `dim` and is <= `preferred`;
    falls back to the full dimension (always legal for BlockSpec)."""
    t = (min(preferred, dim) // align) * align
    while t >= align:
        if dim % t == 0:
            return t
        t -= align
    return dim


def _cparams(sem):
    return pltpu.CompilerParams(dimension_semantics=sem,
                                vmem_limit_bytes=_VMEM_LIMIT)


# -------------------- tiled matmul + bias (QKV / Q / KV) -------------------

def _linear_kernel(x_ref, w_ref, b_ref, o_ref, acc_ref):
    k = pl.program_id(2)

    @pl.when(k == 0)
    def _init():
        acc_ref[...] = jnp.zeros_like(acc_ref)

    acc_ref[...] += jnp.dot(x_ref[...], w_ref[...],
                            preferred_element_type=jnp.float32)

    @pl.when(k == pl.num_programs(2) - 1)
    def _finalize():
        o_ref[...] = (acc_ref[...] + b_ref[...]).astype(o_ref.dtype)


def linear(x, w, b):
    """x: [M, K] (bf16) @ w: [K, N] (bf16) + b: [N] (f32) -> [M, N] bf16."""
    M, K = x.shape
    N = w.shape[1]
    tm = _pick_tile(M, 512, 16)
    tn = _pick_tile(N, 1024, 128)
    tk = _pick_tile(K, 1024, 128)
    return pl.pallas_call(
        _linear_kernel,
        out_shape=jax.ShapeDtypeStruct((M, N), jnp.bfloat16),
        grid=(M // tm, N // tn, K // tk),
        in_specs=[pl.BlockSpec((tm, tk), lambda i, j, k: (i, k)),
                  pl.BlockSpec((tk, tn), lambda i, j, k: (k, j)),
                  pl.BlockSpec((1, tn), lambda i, j, k: (0, j))],
        out_specs=pl.BlockSpec((tm, tn), lambda i, j, k: (i, j)),
        scratch_shapes=[pltpu.VMEM((tm, tn), jnp.float32)],
        compiler_params=_cparams(("parallel", "parallel", "arbitrary")),
    )(x, w, b.reshape(1, N))


# ---------- fused output-projection + residual add + LayerNorm -------------

def _proj_res_ln_kernel(x_ref, w_ref, b_ref, r_ref, g_ref, beta_ref,
                        o_ref, acc_ref, *, eps):
    k = pl.program_id(1)

    @pl.when(k == 0)
    def _init():
        acc_ref[...] = jnp.zeros_like(acc_ref)

    acc_ref[...] += jnp.dot(x_ref[...], w_ref[...],
                            preferred_element_type=jnp.float32)

    @pl.when(k == pl.num_programs(1) - 1)
    def _finalize():
        z = acc_ref[...] + b_ref[...] + r_ref[...].astype(jnp.float32)
        mu = jnp.mean(z, axis=-1, keepdims=True)
        var = jnp.mean(jnp.square(z - mu), axis=-1, keepdims=True)
        o_ref[...] = ((z - mu) * jax.lax.rsqrt(var + eps)
                      * g_ref[...] + beta_ref[...]).astype(o_ref.dtype)


def proj_residual_layernorm(x, w, b, residual, gamma, beta, eps=1e-5):
    """LayerNorm(residual + (x @ w + b)); x: [M, K] bf16 -> [M, N] bf16."""
    M, K = x.shape
    N = w.shape[1]
    tm = _pick_tile(M, 256, 16)
    tk = _pick_tile(K, 1024, 128)
    kernel = functools.partial(_proj_res_ln_kernel, eps=eps)
    return pl.pallas_call(
        kernel,
        out_shape=jax.ShapeDtypeStruct((M, N), jnp.bfloat16),
        grid=(M // tm, K // tk),
        in_specs=[pl.BlockSpec((tm, tk), lambda i, k: (i, k)),
                  pl.BlockSpec((tk, N), lambda i, k: (k, 0)),
                  pl.BlockSpec((1, N), lambda i, k: (0, 0)),
                  pl.BlockSpec((tm, N), lambda i, k: (i, 0)),
                  pl.BlockSpec((1, N), lambda i, k: (0, 0)),
                  pl.BlockSpec((1, N), lambda i, k: (0, 0))],
        out_specs=pl.BlockSpec((tm, N), lambda i, k: (i, 0)),
        scratch_shapes=[pltpu.VMEM((tm, N), jnp.float32)],
        compiler_params=_cparams(("parallel", "arbitrary")),
    )(x, w, b.reshape(1, N), residual, gamma.reshape(1, N),
      beta.reshape(1, N))


# ------------- fused FFN (d_ff-tiled) + residual + LayerNorm ---------------

def _ffn_res_ln_kernel(x_ref, w1_ref, b1_ref, w2_ref, b2_ref,
                       g_ref, beta_ref, o_ref, acc_ref, *, eps):
    f = pl.program_id(1)

    @pl.when(f == 0)
    def _init():
        acc_ref[...] = jnp.zeros_like(acc_ref)

    # hidden chunk for this d_ff tile: relu(x @ w1[:, f] + b1[f])
    h = jnp.dot(x_ref[...], w1_ref[...],
                preferred_element_type=jnp.float32) + b1_ref[...]
    h = jnp.maximum(h, 0.0)
    acc_ref[...] += jnp.dot(h.astype(w2_ref.dtype), w2_ref[...],
                            preferred_element_type=jnp.float32)

    @pl.when(f == pl.num_programs(1) - 1)
    def _finalize():
        z = acc_ref[...] + b2_ref[...] + x_ref[...].astype(jnp.float32)
        mu = jnp.mean(z, axis=-1, keepdims=True)
        var = jnp.mean(jnp.square(z - mu), axis=-1, keepdims=True)
        o_ref[...] = ((z - mu) * jax.lax.rsqrt(var + eps) * g_ref[...]
                      + beta_ref[...]).astype(o_ref.dtype)


def ffn_residual_layernorm(x, w1, b1, w2, b2, gamma, beta, eps=1e-5):
    """LayerNorm(x + relu(x@w1+b1)@w2+b2), tiled over rows and d_ff."""
    M, D = x.shape
    F = w1.shape[1]
    tm = _pick_tile(M, 256, 16)
    tf = _pick_tile(F, 512, 128)
    kernel = functools.partial(_ffn_res_ln_kernel, eps=eps)
    return pl.pallas_call(
        kernel,
        out_shape=jax.ShapeDtypeStruct((M, D), jnp.float32),
        grid=(M // tm, F // tf),
        in_specs=[pl.BlockSpec((tm, D), lambda i, f: (i, 0)),
                  pl.BlockSpec((D, tf), lambda i, f: (0, f)),
                  pl.BlockSpec((1, tf), lambda i, f: (0, f)),
                  pl.BlockSpec((tf, D), lambda i, f: (f, 0)),
                  pl.BlockSpec((1, D), lambda i, f: (0, 0)),
                  pl.BlockSpec((1, D), lambda i, f: (0, 0)),
                  pl.BlockSpec((1, D), lambda i, f: (0, 0))],
        out_specs=pl.BlockSpec((tm, D), lambda i, f: (i, 0)),
        scratch_shapes=[pltpu.VMEM((tm, D), jnp.float32)],
        compiler_params=_cparams(("parallel", "arbitrary")),
    )(x, w1, b1.reshape(1, F), w2, b2.reshape(1, D),
      gamma.reshape(1, D), beta.reshape(1, D))


# -------------------- flash attention (online softmax) ---------------------

def _flash_attn_kernel(q_ref, k_ref, v_ref, mask_ref, o_ref,
                       m_scr, l_scr, acc_scr, *, num_heads, dk):
    ki = pl.program_id(2)

    @pl.when(ki == 0)
    def _init():
        m_scr[...] = jnp.full_like(m_scr, -jnp.inf)
        l_scr[...] = jnp.zeros_like(l_scr)
        acc_scr[...] = jnp.zeros_like(acc_scr)

    keep = mask_ref[...] > 0                         # [tq, tk]
    # TODO(synk): when dk % 128 == 0, switch to a per-head grid axis with a
    # lane-aligned [tq, dk] BlockSpec instead of in-kernel column slices.
    for h in range(num_heads):                       # static unroll over heads
        sl = slice(h * dk, (h + 1) * dk)
        # 1/sqrt(dk) is pre-folded into wq/bq, so q is already scaled.
        s = jax.lax.dot_general(q_ref[:, sl], k_ref[:, sl],
                                (((1,), (1,)), ((), ())),
                                preferred_element_type=jnp.float32)
        s = jnp.where(keep, s, jnp.float32(-1e9))
        m_prev = m_scr[h]
        m_new = jnp.maximum(m_prev, jnp.max(s, axis=-1, keepdims=True))
        alpha = jnp.exp(m_prev - m_new)
        p = jnp.exp(s - m_new)
        l_scr[h] = alpha * l_scr[h] + jnp.sum(p, axis=-1, keepdims=True)
        acc_scr[h] = alpha * acc_scr[h] + jnp.dot(
            p.astype(v_ref.dtype), v_ref[:, sl],
            preferred_element_type=jnp.float32)
        m_scr[h] = m_new

    @pl.when(ki == pl.num_programs(2) - 1)
    def _finalize():
        for h in range(num_heads):
            sl = slice(h * dk, (h + 1) * dk)
            inv = pl.reciprocal(l_scr[h], approx=False)
            o_ref[:, sl] = (acc_scr[h] * inv).astype(o_ref.dtype)


def flash_attention(q_arr, q_slot, k_arr, k_slot, v_arr, v_slot, mask,
                    d_model, num_heads):
    """q_arr: [B, Sq, nq*D]; k_arr/v_arr: [B, Sk, nk*D]; `*_slot` selects the
    D-wide column block (zero-copy read out of packed QKV/KV projections).
    mask: [B, 1, Sq, Sk] (>0 == keep).  Returns [B, Sq, D] bf16."""
    B, Sq = q_arr.shape[0], q_arr.shape[1]
    Sk = k_arr.shape[1]
    dk = d_model // num_heads
    tq = _pick_tile(Sq, 256, 16)
    tk = _pick_tile(Sk, 512, 128)
    kernel = functools.partial(_flash_attn_kernel, num_heads=num_heads, dk=dk)
    q_spec = pl.BlockSpec((None, tq, d_model),
                          lambda b, qi, ki, s=q_slot: (b, qi, s))
    k_spec = pl.BlockSpec((None, tk, d_model),
                          lambda b, qi, ki, s=k_slot: (b, ki, s))
    v_spec = pl.BlockSpec((None, tk, d_model),
                          lambda b, qi, ki, s=v_slot: (b, ki, s))
    # TODO(synk): for long sequences generate causal/padding masks in-kernel
    # with broadcasted_iota + length scalars instead of DMA'ing [B,1,S,S].
    m_spec = pl.BlockSpec((None, None, tq, tk),
                          lambda b, qi, ki: (b, 0, qi, ki))
    return pl.pallas_call(
        kernel,
        out_shape=jax.ShapeDtypeStruct((B, Sq, d_model), jnp.bfloat16),
        grid=(B, Sq // tq, Sk // tk),
        in_specs=[q_spec, k_spec, v_spec, m_spec],
        out_specs=pl.BlockSpec((None, tq, d_model),
                               lambda b, qi, ki: (b, qi, 0)),
        scratch_shapes=[pltpu.VMEM((num_heads, tq, 1), jnp.float32),
                        pltpu.VMEM((num_heads, tq, 1), jnp.float32),
                        pltpu.VMEM((num_heads, tq, dk), jnp.float32)],
        compiler_params=_cparams(("parallel", "parallel", "arbitrary")),
    )(q_arr, k_arr, v_arr, mask)


def _slot_views(packed, n_slots, d_model):
    """[(array, column_block)] per slot; zero-copy when d_model is a lane
    multiple, otherwise falls back to materialized slices."""
    if n_slots == 1 or d_model % 128 == 0:
        return [(packed, s) for s in range(n_slots)]
    return [(packed[..., s * d_model:(s + 1) * d_model], 0)
            for s in range(n_slots)]


# ------------------------------- JAX glue ----------------------------------

def prepare_params(params, num_heads):
    """Pre-fuse QKV/KV weights, pre-fold the 1/sqrt(dk) scale into wq/bq and
    cast matmul weights to bf16 (done once, not per forward call)."""
    bf = lambda w: w.astype(jnp.bfloat16)
    d_model = params["self_attn"]["wq"].shape[0]
    scale = 1.0 / math.sqrt(d_model // num_heads)
    sa, ca = params["self_attn"], params["cross_attn"]
    return {
        "sa_w_qkv": bf(jnp.concatenate(
            [sa["wq"] * scale, sa["wk"], sa["wv"]], axis=1)),
        "sa_b_qkv": jnp.concatenate([sa["bq"] * scale, sa["bk"], sa["bv"]]),
        "sa_wo": bf(sa["wo"]), "sa_bo": sa["bo"],
        "ca_wq": bf(ca["wq"] * scale), "ca_bq": ca["bq"] * scale,
        "ca_w_kv": bf(jnp.concatenate([ca["wk"], ca["wv"]], axis=1)),
        "ca_b_kv": jnp.concatenate([ca["bk"], ca["bv"]]),
        "ca_wo": bf(ca["wo"]), "ca_bo": ca["bo"],
        "ff_w1": bf(params["ff_w1"]), "ff_b1": params["ff_b1"],
        "ff_w2": bf(params["ff_w2"]), "ff_b2": params["ff_b2"],
        "norm1_g": params["norm1_g"], "norm1_b": params["norm1_b"],
        "norm2_g": params["norm2_g"], "norm2_b": params["norm2_b"],
        "norm3_g": params["norm3_g"], "norm3_b": params["norm3_b"],
    }


def decoder_layer(x, enc_output, src_mask, tgt_mask, dev, num_heads):
    B, S, D = x.shape
    Sk = enc_output.shape[1]
    x2 = x.astype(jnp.bfloat16).reshape(B * S, D)

    # ---- self-attention: fused QKV proj -> flash attn -> Wo + add + LN ----
    qkv = linear(x2, dev["sa_w_qkv"], dev["sa_b_qkv"]).reshape(B, S, 3 * D)
    (qa, qs), (ka, ks), (va, vs) = _slot_views(qkv, 3, D)
    attn = flash_attention(qa, qs, ka, ks, va, vs, tgt_mask, D, num_heads)
    x2 = proj_residual_layernorm(attn.reshape(B * S, D), dev["sa_wo"],
                                 dev["sa_bo"], x2,
                                 dev["norm1_g"], dev["norm1_b"])

    # ---- cross-attention: Q proj + fused KV proj -> flash attn -> ... ----
    q = linear(x2, dev["ca_wq"], dev["ca_bq"]).reshape(B, S, D)
    kv = linear(enc_output.astype(jnp.bfloat16).reshape(B * Sk, D),
                dev["ca_w_kv"], dev["ca_b_kv"]).reshape(B, Sk, 2 * D)
    (ka, ks), (va, vs) = _slot_views(kv, 2, D)
    attn = flash_attention(q, 0, ka, ks, va, vs, src_mask, D, num_heads)
    x2 = proj_residual_layernorm(attn.reshape(B * S, D), dev["ca_wo"],
                                 dev["ca_bo"], x2,
                                 dev["norm2_g"], dev["norm2_b"])

    # ---- position-wise feed forward + residual + LN (fused, d_ff tiled) ----
    out = ffn_residual_layernorm(x2, dev["ff_w1"], dev["ff_b1"],
                                 dev["ff_w2"], dev["ff_b2"],
                                 dev["norm3_g"], dev["norm3_b"])
    return out.reshape(B, S, D)


# --------------------------- pure-JAX reference -----------------------------

def _reference(x, enc, src_mask, tgt_mask, params, num_heads):
    def mha(q_in, k_in, v_in, p, mask):
        B, Sq, D = q_in.shape
        Sk = k_in.shape[1]
        dk = D // num_heads
        q = (q_in @ p["wq"] + p["bq"]).reshape(B, Sq, num_heads, dk).transpose(0, 2, 1, 3)
        k = (k_in @ p["wk"] + p["bk"]).reshape(B, Sk, num_heads, dk).transpose(0, 2, 1, 3)
        v = (v_in @ p["wv"] + p["bv"]).reshape(B, Sk, num_heads, dk).transpose(0, 2, 1, 3)
        s = jnp.einsum("bhqd,bhkd->bhqk", q, k) / math.sqrt(dk)
        s = jnp.where(mask > 0, s, -1e9)
        a = jax.nn.softmax(s, axis=-1)
        o = jnp.einsum("bhqk,bhkd->bhqd", a, v).transpose(0, 2, 1, 3).reshape(B, Sq, D)
        return o @ p["wo"] + p["bo"]

    def ln(z, g, b, eps=1e-5):
        mu = z.mean(-1, keepdims=True)
        var = ((z - mu) ** 2).mean(-1, keepdims=True)
        return (z - mu) / jnp.sqrt(var + eps) * g + b

    h = ln(x + mha(x, x, x, params["self_attn"], tgt_mask),
           params["norm1_g"], params["norm1_b"])
    h = ln(h + mha(h, enc, enc, params["cross_attn"], src_mask),
           params["norm2_g"], params["norm2_b"])
    ff = (jnp.maximum(h @ params["ff_w1"] + params["ff_b1"], 0.0)
          @ params["ff_w2"] + params["ff_b2"])
    return ln(h + ff, params["norm3_g"], params["norm3_b"])


# ------------------------------ init / main --------------------------------

def _init_mha_params(key, d_model):
    ks = jax.random.split(key, 4)
    mk = lambda k: 0.02 * jax.random.normal(k, (d_model, d_model), jnp.float32)
    z = jnp.zeros((d_model,), jnp.float32)
    return {"wq": mk(ks[0]), "bq": z, "wk": mk(ks[1]), "bk": z,
            "wv": mk(ks[2]), "bv": z, "wo": mk(ks[3]), "bo": z}


def init_params(key, d_model, d_ff):
    k1, k2, k3, k4 = jax.random.split(key, 4)
    return {
        "self_attn": _init_mha_params(k1, d_model),
        "cross_attn": _init_mha_params(k2, d_model),
        "ff_w1": 0.02 * jax.random.normal(k3, (d_model, d_ff), jnp.float32),
        "ff_b1": jnp.zeros((d_ff,), jnp.float32),
        "ff_w2": 0.02 * jax.random.normal(k4, (d_ff, d_model), jnp.float32),
        "ff_b2": jnp.zeros((d_model,), jnp.float32),
        "norm1_g": jnp.ones((d_model,), jnp.float32),
        "norm1_b": jnp.zeros((d_model,), jnp.float32),
        "norm2_g": jnp.ones((d_model,), jnp.float32),
        "norm2_b": jnp.zeros((d_model,), jnp.float32),
        "norm3_g": jnp.ones((d_model,), jnp.float32),
        "norm3_b": jnp.zeros((d_model,), jnp.float32),
    }


if __name__ == "__main__":
    # batch, seq, d_model, num_heads, d_ff  (d_model lane-aligned -> zero-copy
    # packed-QKV reads; dk = 32 per head).
    B, S, D, H, F = 2, 8, 128, 4, 256
    key = jax.random.PRNGKey(0)
    kx, ke, kp = jax.random.split(key, 3)

    x = jax.random.normal(kx, (B, S, D), jnp.float32)
    enc_output = jax.random.normal(ke, (B, S, D), jnp.float32)
    # src_mask: all-ones padding mask; tgt_mask: causal; both [B, 1, Sq, Sk].
    src_mask = jnp.ones((B, 1, S, S), jnp.float32)
    tgt_mask = jnp.broadcast_to(
        jnp.tril(jnp.ones((S, S), jnp.float32))[None, None], (B, 1, S, S))

    params = init_params(kp, D, F)
    dev_params = prepare_params(params, H)

    out = decoder_layer(x, enc_output, src_mask, tgt_mask, dev_params, H)
    out = jax.block_until_ready(out)
    assert out.shape == (B, S, D)
    assert bool(jnp.all(jnp.isfinite(out)))

    ref = _reference(x, enc_output, src_mask, tgt_mask, params, H)
    err = float(jnp.max(jnp.abs(out - ref)))
    # bf16 storage + f32 accumulation vs. pure-f32 reference.
    assert err < 5e-2, f"max abs error vs reference: {err}"

    print("KERNEL_OK")
</pallas_src>

<mosaic_0001>
module attributes {stable_mosaic.version = 11 : i64} {
  func.func @_linear_kernel(%arg0: i32, %arg1: i32, %arg2: i32, %arg3: memref<16x128xbf16, #tpu.memory_space<vmem>>, %arg4: memref<128x384xbf16, #tpu.memory_space<vmem>>, %arg5: memref<1x384xf32, #tpu.memory_space<vmem>>, %arg6: memref<16x384xbf16, #tpu.memory_space<vmem>>, %arg7: memref<16x384xf32, #tpu.memory_space<vmem>>) attributes {dimension_semantics = [#tpu.dimension_semantics<parallel>, #tpu.dimension_semantics<parallel>, #tpu.dimension_semantics<arbitrary>], iteration_bounds = array<i64: 1, 1, 1>, scalar_prefetch = 0 : i64, scratch_operands = 1 : i64, tpu.core_type = #tpu.core_type<tc>, window_params = [{transform_indices = @transform_0, window_bounds = array<i64: 16, 128>}, {transform_indices = @transform_1, window_bounds = array<i64: 128, 384>}, {transform_indices = @transform_2, window_bounds = array<i64: 1, 384>}, {transform_indices = @transform_3, window_bounds = array<i64: 16, 384>}]} {
    %c0_i32 = arith.constant 0 : i32
    %0 = arith.cmpi eq, %arg2, %c0_i32 : i32
    %1 = arith.extui %0 : i1 to i32
    %c0_i32_0 = arith.constant 0 : i32
    %2 = arith.cmpi ne, %1, %c0_i32_0 : i32
    scf.if %2 {
      %cst_10 = arith.constant 0.000000e+00 : f32
      %12 = vector.broadcast %cst_10 : f32 to vector<16x384xf32>
      %c0_11 = arith.constant 0 : index
      %c0_12 = arith.constant 0 : index
      %13 = vector.load %arg7[%c0_11, %c0_12] : memref<16x384xf32, #tpu.memory_space<vmem>>, vector<16x384xf32>
      tpu.vector_store %arg7[%c0_11, %c0_12], %12 {strides = array<i32>} : memref<16x384xf32, #tpu.memory_space<vmem>>, vector<16x384xf32>,
    } else {
    }
    %c0 = arith.constant 0 : index
    %c0_1 = arith.constant 0 : index
    %3 = vector.load %arg7[%c0, %c0_1] : memref<16x384xf32, #tpu.memory_space<vmem>>, vector<16x384xf32>
    %c0_2 = arith.constant 0 : index
    %c0_3 = arith.constant 0 : index
    %4 = vector.load %arg3[%c0_2, %c0_3] : memref<16x128xbf16, #tpu.memory_space<vmem>>, vector<16x128xbf16>
    %c0_4 = arith.constant 0 : index
    %c0_5 = arith.constant 0 : index
    %5 = vector.load %arg4[%c0_4, %c0_5] : memref<128x384xbf16, #tpu.memory_space<vmem>>, vector<128x384xbf16>
    %cst = arith.constant dense<0.000000e+00> : vector<16x384xf32>
    %6 = tpu.matmul %4, %5, %cst {dimension_numbers = #tpu.dot_dimension_numbers<[1], [0], [0], [1], [0, 0, 1, 1], [], []>} : vector<16x128xbf16>, vector<128x384xbf16>, vector<16x384xf32> -> vector<16x384xf32>
    %7 = arith.addf %3, %6 : vector<16x384xf32>
    %c0_6 = arith.constant 0 : index
    %c0_7 = arith.constant 0 : index
    %8 = vector.load %arg7[%c0_6, %c0_7] : memref<16x384xf32, #tpu.memory_space<vmem>>, vector<16x384xf32>
    tpu.vector_store %arg7[%c0_6, %c0_7], %7 {strides = array<i32>} : memref<16x384xf32, #tpu.memory_space<vmem>>, vector<16x384xf32>,
    %c0_i32_8 = arith.constant 0 : i32
    %9 = arith.cmpi eq, %arg2, %c0_i32_8 : i32
    %10 = arith.extui %9 : i1 to i32
    %c0_i32_9 = arith.constant 0 : i32
    %11 = arith.cmpi ne, %10, %c0_i32_9 : i32
    scf.if %11 {
      %c0_10 = arith.constant 0 : index
      %c0_11 = arith.constant 0 : index
      %12 = vector.load %arg7[%c0_10, %c0_11] : memref<16x384xf32, #tpu.memory_space<vmem>>, vector<16x384xf32>
      %c0_12 = arith.constant 0 : index
      %c0_13 = arith.constant 0 : index
      %13 = vector.load %arg5[%c0_12, %c0_13] : memref<1x384xf32, #tpu.memory_space<vmem>>, vector<1x384xf32>
      %14 = vector.broadcast %13 : vector<1x384xf32> to vector<16x384xf32>
      %15 = arith.addf %12, %14 : vector<16x384xf32>
      %16 = arith.truncf %15 : vector<16x384xf32> to vector<16x384xbf16>
      %c0_14 = arith.constant 0 : index
      %c0_15 = arith.constant 0 : index
      %17 = vector.load %arg6[%c0_14, %c0_15] : memref<16x384xbf16, #tpu.memory_space<vmem>>, vector<16x384xbf16>
      tpu.vector_store %arg6[%c0_14, %c0_15], %16 {strides = array<i32>} : memref<16x384xbf16, #tpu.memory_space<vmem>>, vector<16x384xbf16>,
    } else {
    }
    return
  }
  func.func @transform_0(%arg0: i32, %arg1: i32, %arg2: i32) -> (i32, i32) {
    %c0_i32 = arith.constant 0 : i32
    return %arg0, %arg2 : i32, i32
  }
  func.func @transform_1(%arg0: i32, %arg1: i32, %arg2: i32) -> (i32, i32) {
    %c0_i32 = arith.constant 0 : i32
    return %arg2, %arg1 : i32, i32
  }
  func.func @transform_2(%arg0: i32, %arg1: i32, %arg2: i32) -> (i32, i32) {
    %c0_i32 = arith.constant 0 : i32
    %c0_i32_0 = arith.constant 0 : i32
    return %c0_i32, %arg1 : i32, i32
  }
  func.func @transform_3(%arg0: i32, %arg1: i32, %arg2: i32) -> (i32, i32) {
    %c0_i32 = arith.constant 0 : i32
    return %arg0, %arg1 : i32, i32
  }
}

</mosaic_0001>

<llo_original>
// kernel: tpu_custom_call.1
$region0: #{tpu_custom_call.1}
  #allocation0 [shape = 'u32[]', space=smem, size = 0x4, offset = 0x4, fixed_abs, tag = 'smem constant byte address 0x4 - core index']
  #allocation1 [shape = 'u32[144,128]{1,0:T(1,128)}', space=vmem, size = 0x12000, scoped, tag = 'internal scratch']
  #allocation2 [shape = 'f32[16,384]{1,0:T(8,128)}', space=vmem, size = 0x6000, scoped, tag = 'scratch operand']
  %s0 = inlined_call_operand.hbm [shape: bf16[16,128], index: 0, kind: input, shape index: {}]
  %s1 = inlined_call_operand.hbm [shape: bf16[128,384], index: 1, kind: input, shape index: {}]
  %s2 = inlined_call_operand.vmem [shape: f32[1,384], index: 2, kind: input, shape index: {}]
  %s3 = inlined_call_operand.hbm [shape: bf16[16,384], index: 3, kind: output, shape index: {}]
  %s4 = sld [smem:[#allocation0]]
  $region38: #{tpu_custom_call.1} parent=0
    _
  %s6 = ssub.s32 1, %s4
  %s7 = scalar_select 0, %s6, %s4
  $region1: #{tpu_custom_call.1} parent=0
    #allocation3 [shape = 'u8[4096]{0}', space=vmem, size = 0x1000, scoped, tag = 'input window, operand 0, single buffered']
    #allocation4 [shape = 's32[1]{0}', space=sflag, size = 0x4, scoped, tag = 'scoped memory for tpu_custom_call.1']
    #allocation5 [shape = 's32[1]{0}', space=sflag, size = 0x4, scoped, tag = 'scoped memory for tpu_custom_call.1']
    #allocation6 [shape = 'u8[98304]{0}', space=vmem, size = 0x18000, scoped, tag = 'input window, operand 1, single buffered']
    #allocation7 [shape = 's32[1]{0}', space=sflag, size = 0x4, scoped, tag = 'scoped memory for tpu_custom_call.1']
    #allocation8 [shape = 'u8[12288]{0}', space=vmem, size = 0x3000, scoped, tag = 'output window, operand 0, single buffered']
    %8 = vsyncpa [#allocation4], 0
    %9 = vsyncpa [#allocation7], 0
    %10 = vsyncpa [#allocation5], 0
    // Predicated region
    $region2: #{tpu_custom_call.1} parent=1 // pred_check
      _
    $region3: #{tpu_custom_call.1} parent=1 // pred_check_branch
      %12 = sbr.rel (0) target = $region5
    $region4: #{tpu_custom_call.1} parent=1 // pred_region
      %s14 = ssub.s32 128, 128
      %15 = vsyncadd [#allocation4], %s14
      %s16 = sshll.u32 [#allocation3], 4
      %s17 = int_to_ptr.vmem [resolvable:$true] %s16
      %22 = dma.hbm_to_vmem [thread:$0]  %s0, 128, %s17, [#allocation4], 64, 64, 4
    $region5: #{tpu_custom_call.1} parent=1 // pred_fallthru
      _
    // Predicated region
    $region6: #{tpu_custom_call.1} parent=1 // pred_check
      _
    $region7: #{tpu_custom_call.1} parent=1 // pred_check_branch
      %24 = sbr.rel (0) target = $region9
    $region8: #{tpu_custom_call.1} parent=1 // pred_region
      %s26 = ssub.s32 3072, 3072
      %27 = vsyncadd [#allocation7], %s26
      %s28 = sshll.u32 [#allocation6], 4
      %s29 = int_to_ptr.vmem [resolvable:$true] %s28
      %34 = dma.hbm_to_vmem [thread:$0]  %s1, 3072, %s29, [#allocation7], 192, 192, 12
    $region9: #{tpu_custom_call.1} parent=1 // pred_fallthru
      _
    // Predicated region
    $region10: #{tpu_custom_call.1} parent=1 // pred_check
      _
    $region11: #{tpu_custom_call.1} parent=1 // pred_check_branch
      %36 = sbr.rel (0) target = $region13
    $region12: #{tpu_custom_call.1} parent=1 // pred_region
      _
    $region13: #{tpu_custom_call.1} parent=1 // pred_fallthru
      _
    // Predicated region
    $region14: #{tpu_custom_call.1} parent=1 // pred_check
      _
    $region15: #{tpu_custom_call.1} parent=1 // pred_check_branch
      %38 = sbr.rel (0) target = $region17
    $region16: #{tpu_custom_call.1} parent=1 // pred_region
      %39 = dma.done [#allocation4], 128
    $region17: #{tpu_custom_call.1} parent=1 // pred_fallthru
      _
    // Predicated region
    $region18: #{tpu_custom_call.1} parent=1 // pred_check
      _
    $region19: #{tpu_custom_call.1} parent=1 // pred_check_branch
      %41 = sbr.rel (0) target = $region21
    $region20: #{tpu_custom_call.1} parent=1 // pred_region
      %42 = dma.done [#allocation7], 3072
    $region21: #{tpu_custom_call.1} parent=1 // pred_fallthru
      _
    %p44 = scmp.eq.s32.totalorder 0, 0
    // Predicated region
    $region22: #{tpu_custom_call.1} parent=1 // pred_check
      %p45 = pneg %p44
    $region23: #{tpu_custom_call.1} parent=1 // pred_check_branch
      %47 = sbr.rel (%p45) target = $region25
    $region24: #{tpu_custom_call.1} parent=1 // pred_region
      %48 = vst [vmem:[#allocation2] sm:$0xff] 0.0
      %49 = vst [vmem:[#allocation2 + $0x8] sm:$0xff] 0.0
      %50 = vst [vmem:[#allocation2 + $0x10] sm:$0xff] 0.0
      %51 = vst [vmem:[#allocation2 + $0x18] sm:$0xff] 0.0
      %52 = vst [vmem:[#allocation2 + $0x20] sm:$0xff] 0.0
      %53 = vst [vmem:[#allocation2 + $0x28] sm:$0xff] 0.0
    $region25: #{tpu_custom_call.1} parent=1 // pred_fallthru
      _
    %v54 = vld [vmem:[#allocation2] sm:$0xff]
    %v55 = vld [vmem:[#allocation2 + $0x8] sm:$0xff]
    %v56 = vld [vmem:[#allocation2 + $0x10] sm:$0xff]
    %v57 = vld [vmem:[#allocation2 + $0x18] sm:$0xff]
    %v58 = vld [vmem:[#allocation2 + $0x20] sm:$0xff]
    %v59 = vld [vmem:[#allocation2 + $0x28] sm:$0xff]
    %v60 = vld [vmem:[#allocation3] sm:$0xf]
    %v61 = vld [vmem:[#allocation3 + $0x4] sm:$0xf]
    %v62 = vld [vmem:[#allocation6] sm:$0xff]
    %v63 = vld [vmem:[#allocation6 + $0x8] sm:$0xf]
    %v64 = vld [vmem:[#allocation6 + $0xc] sm:$0xff]
    %v65 = vld [vmem:[#allocation6 + $0x14] sm:$0xf]
    %v66 = vld [vmem:[#allocation6 + $0x18] sm:$0xff]
    %v67 = vld [vmem:[#allocation6 + $0x20] sm:$0xf]
    %v68 = vld [vmem:[#allocation6 + $0x24] sm:$0xff]
    %v69 = vld [vmem:[#allocation6 + $0x2c] sm:$0xf]
    %v70 = vld [vmem:[#allocation6 + $0x30] sm:$0xff]
    %v71 = vld [vmem:[#allocation6 + $0x38] sm:$0xf]
    %v72 = vld [vmem:[#allocation6 + $0x3c] sm:$0xff]
    %v73 = vld [vmem:[#allocation6 + $0x44] sm:$0xf]
    %v74 = vld [vmem:[#allocation6 + $0x48] sm:$0xff]
    %v75 = vld [vmem:[#allocation6 + $0x50] sm:$0xf]
    %v76 = vld [vmem:[#allocation6 + $0x54] sm:$0xff]
    %v77 = vld [vmem:[#allocation6 + $0x5c] sm:$0xf]
    %v78 = vld [vmem:[#allocation6 + $0x60] sm:$0xff]
    %v79 = vld [vmem:[#allocation6 + $0x68] sm:$0xf]
    %v80 = vld [vmem:[#allocation6 + $0x6c] sm:$0xff]
    %v81 = vld [vmem:[#allocation6 + $0x74] sm:$0xf]
    %v82 = vld [vmem:[#allocation6 + $0x78] sm:$0xff]
    %v83 = vld [vmem:[#allocation6 + $0x80] sm:$0xf]
    %v84 = vld [vmem:[#allocation6 + $0x84] sm:$0xff]
    %v85 = vld [vmem:[#allocation6 + $0x8c] sm:$0xf]
    %v86 = vld [vmem:[#allocation6 + $0x90] sm:$0xff]
    %v87 = vld [vmem:[#allocation6 + $0x98] sm:$0xf]
    %v88 = vld [vmem:[#allocation6 + $0x9c] sm:$0xff]
    %v89 = vld [vmem:[#allocation6 + $0xa4] sm:$0xf]
    %v90 = vld [vmem:[#allocation6 + $0xa8] sm:$0xff]
    %v91 = vld [vmem:[#allocation6 + $0xb0] sm:$0xf]
    %v92 = vld [vmem:[#allocation6 + $0xb4] sm:$0xff]
    %v93 = vld [vmem:[#allocation6 + $0xbc] sm:$0xf]
    %v96 = vunpack.c.l.b16 %v60
    %v97 = vunpack.c.l.b16 %v61
    %v98 = vpack.c.b16 %v97, %v96
    %v132 = vunpack.c.l.b16 %v62
    %v133 = vunpack.c.h.b16 %v62
    %v134 = vunpack.c.l.b16 %v63
    %v135 = vunpack.c.l.b16 %v64
    %v136 = vunpack.c.h.b16 %v64
    %v137 = vunpack.c.l.b16 %v65
    %v138 = vunpack.c.l.b16 %v66
    %v139 = vunpack.c.h.b16 %v66
    %v140 = vunpack.c.l.b16 %v67
    %v141 = vunpack.c.l.b16 %v68
    %v142 = vunpack.c.h.b16 %v68
    %v143 = vunpack.c.l.b16 %v69
    %v144 = vunpack.c.l.b16 %v70
    %v145 = vunpack.c.h.b16 %v70
    %v146 = vunpack.c.l.b16 %v71
    %v147 = vunpack.c.l.b16 %v72
    %v148 = vunpack.c.h.b16 %v72
    %v149 = vunpack.c.l.b16 %v73
    %v150 = vunpack.c.l.b16 %v74
    %v151 = vunpack.c.h.b16 %v74
    %v152 = vunpack.c.l.b16 %v75
    %v153 = vunpack.c.l.b16 %v76
    %v154 = vunpack.c.h.b16 %v76
    %v155 = vunpack.c.l.b16 %v77
    %v156 = vunpack.c.l.b16 %v78
    %v157 = vunpack.c.h.b16 %v78
    %v158 = vunpack.c.l.b16 %v79
    %v159 = vunpack.c.l.b16 %v80
    %v160 = vunpack.c.h.b16 %v80
    %v161 = vunpack.c.l.b16 %v81
    %v162 = vunpack.c.l.b16 %v82
    %v163 = vunpack.c.h.b16 %v82
    %v164 = vunpack.c.l.b16 %v83
    %v165 = vunpack.c.l.b16 %v84
    %v166 = vunpack.c.h.b16 %v84
    %v167 = vunpack.c.l.b16 %v85
    %v168 = vunpack.c.l.b16 %v86
    %v169 = vunpack.c.h.b16 %v86
    %v170 = vunpack.c.l.b16 %v87
    %v171 = vunpack.c.l.b16 %v88
    %v172 = vunpack.c.h.b16 %v88
    %v173 = vunpack.c.l.b16 %v89
    %v174 = vunpack.c.l.b16 %v90
    %v175 = vunpack.c.h.b16 %v90
    %v176 = vunpack.c.l.b16 %v91
    %v177 = vunpack.c.l.b16 %v92
    %v178 = vunpack.c.h.b16 %v92
    %v179 = vunpack.c.l.b16 %v93
    %v180 = vpack.c.b16 %v135, %v132
    %v181 = vpack.c.b16 %v136, %v133
    %v182 = vpack.c.b16 %v137, %v134
    %v183 = vpack.c.b16 %v141, %v138
    %v184 = vpack.c.b16 %v142, %v139
    %v185 = vpack.c.b16 %v143, %v140
    %v186 = vpack.c.b16 %v147, %v144
    %v187 = vpack.c.b16 %v148, %v145
    %v188 = vpack.c.b16 %v149, %v146
    %v189 = vpack.c.b16 %v153, %v150
    %v190 = vpack.c.b16 %v154, %v151
    %v191 = vpack.c.b16 %v155, %v152
    %v192 = vpack.c.b16 %v159, %v156
    %v193 = vpack.c.b16 %v160, %v157
    %v194 = vpack.c.b16 %v161, %v158
    %v195 = vpack.c.b16 %v165, %v162
    %v196 = vpack.c.b16 %v166, %v163
    %v197 = vpack.c.b16 %v167, %v164
    %v198 = vpack.c.b16 %v171, %v168
    %v199 = vpack.c.b16 %v172, %v169
    %v200 = vpack.c.b16 %v173, %v170
    %v201 = vpack.c.b16 %v177, %v174
    %v202 = vpack.c.b16 %v178, %v175
    %v203 = vpack.c.b16 %v179, %v176
    %228 = vmatprep.subr.bf16.mxu0 %v181
    %229 = vmatpush1.bf16.msra.mxu0 %v180
    %230 = vmatprep.subr.bf16.mxu0 %v184
    %231 = vmatpush1.bf16.msra.mxu0 %v183
    %232 = vmatprep.subr.bf16.mxu0 %v187
    %233 = vmatpush1.bf16.msra.mxu0 %v186
    %234 = vmatprep.subr.bf16.mxu0 %v190
    %235 = vmatpush1.bf16.msra.mxu0 %v189
    %236 = vmatprep.subr.bf16.mxu0 %v193
    %237 = vmatpush1.bf16.msra.mxu0 %v192
    %238 = vmatprep.subr.bf16.mxu0 %v196
    %239 = vmatpush1.bf16.msra.mxu0 %v195
    %240 = vmatprep.subr.bf16.mxu0 %v199
    %241 = vmatpush1.bf16.msra.mxu0 %v198
    %242 = vmatprep.subr.bf16.mxu0 %v202
    %243 = vmatpush1.bf16.msra.mxu0 %v201
    %244 = vmatprep.subr.bf16.mxu0 0
    %245 = vmatpush1.bf16.msra.mxu0 0
    %246 = vmatprep.subr.bf16.mxu0 0
    %247 = vmatpush1.bf16.msra.mxu0 0
    %248 = vmatprep.subr.bf16.mxu0 0
    %249 = vmatpush1.bf16.msra.mxu0 0
    %250 = vmatprep.subr.bf16.mxu0 0
    %251 = vmatpush1.bf16.msra.mxu0 0
    %252 = vmatprep.subr.bf16.mxu0 0
    %253 = vmatpush1.bf16.msra.mxu0 0
    %254 = vmatprep.subr.bf16.mxu0 0
    %255 = vmatpush1.bf16.msra.mxu0 0
    %256 = vmatprep.subr.bf16.mxu0 0
    %257 = vmatpush1.bf16.msra.mxu0 0
    %258 = vmatprep.subr.bf16.mxu0 0
    %259 = vmatpush1.bf16.msra.mxu0 0
    %260 = vmatprep.mubr.bf16.mxu0 0
    %261 = vmatmul.mubr.bf16.gmra.mrb[0].mxu0 %v98
    %v262 = vpop.f32.mrb[0].mxu0
    %v263 = vadd.f32 0.0, %v262
    %v264 = vpop.f32.mrb[0].mxu0
    %v265 = vadd.f32 0.0, %v264
    %v266 = vpop.f32.mrb[0].mxu0
    %v267 = vadd.f32 0.0, %v266
    %v268 = vpop.f32.mrb[0].mxu0
    %v269 = vadd.f32 0.0, %v268
    %270 = vdwg.mxu0
    %271 = vmatprep.subr.bf16.mxu0 0
    %272 = vmatpush1.bf16.msra.mxu0 %v182
    %273 = vmatprep.subr.bf16.mxu0 0
    %274 = vmatpush1.bf16.msra.mxu0 %v185
    %275 = vmatprep.subr.bf16.mxu0 0
    %276 = vmatpush1.bf16.msra.mxu0 %v188
    %277 = vmatprep.subr.bf16.mxu0 0
    %278 = vmatpush1.bf16.msra.mxu0 %v191
    %279 = vmatprep.subr.bf16.mxu0 0
    %280 = vmatpush1.bf16.msra.mxu0 %v194
    %281 = vmatprep.subr.bf16.mxu0 0
    %282 = vmatpush1.bf16.msra.mxu0 %v197
    %283 = vmatprep.subr.bf16.mxu0 0
    %284 = vmatpush1.bf16.msra.mxu0 %v200
    %285 = vmatprep.subr.bf16.mxu0 0
    %286 = vmatpush1.bf16.msra.mxu0 %v203
    %287 = vmatprep.subr.bf16.mxu0 0
    %288 = vmatpush1.bf16.msra.mxu0 0
    %289 = vmatprep.subr.bf16.mxu0 0
    %290 = vmatpush1.bf16.msra.mxu0 0
    %291 = vmatprep.subr.bf16.mxu0 0
    %292 = vmatpush1.bf16.msra.mxu0 0
    %293 = vmatprep.subr.bf16.mxu0 0
    %294 = vmatpush1.bf16.msra.mxu0 0
    %295 = vmatprep.subr.bf16.mxu0 0
    %296 = vmatpush1.bf16.msra.mxu0 0
    %297 = vmatprep.subr.bf16.mxu0 0
    %298 = vmatpush1.bf16.msra.mxu0 0
    %299 = vmatprep.subr.bf16.mxu0 0
    %300 = vmatpush1.bf16.msra.mxu0 0
    %301 = vmatprep.subr.bf16.mxu0 0
    %302 = vmatpush1.bf16.msra.mxu0 0
    %303 = vmatprep.mubr.bf16.mxu0 0
    %304 = vmatmul.mubr.bf16.gmra.mrb[0].mxu0 %v98
    %v305 = vpop.f32.mrb[0].mxu0
    %v306 = vadd.f32 0.0, %v305
    %v307 = vpop.f32.mrb[0].mxu0
    %v308 = vpop.f32.mrb[0].mxu0
    %v309 = vadd.f32 0.0, %v308
    %v310 = vpop.f32.mrb[0].mxu0
    %311 = vdwg.mxu0
    %v312 = vadd.f32 %v54, %v263
    %v313 = vadd.f32 %v55, %v265
    %v314 = vadd.f32 %v56, %v306
    %v315 = vadd.f32 %v57, %v267
    %v316 = vadd.f32 %v58, %v269
    %v317 = vadd.f32 %v59, %v309
    %318 = vst [vmem:[#allocation2] sm:$0xff] %v312
    %319 = vst [vmem:[#allocation2 + $0x8] sm:$0xff] %v313
    %320 = vst [vmem:[#allocation2 + $0x10] sm:$0xff] %v314
    %321 = vst [vmem:[#allocation2 + $0x18] sm:$0xff] %v315
    %322 = vst [vmem:[#allocation2 + $0x20] sm:$0xff] %v316
    %323 = vst [vmem:[#allocation2 + $0x28] sm:$0xff] %v317
    // Predicated region
    $region26: #{tpu_custom_call.1} parent=1 // pred_check
      %p324 = pneg %p44
    $region27: #{tpu_custom_call.1} parent=1 // pred_check_branch
      %326 = sbr.rel (%p324) target = $region29
    $region28: #{tpu_custom_call.1} parent=1 // pred_region
      %v327 = vld [vmem:[#allocation2] sm:$0xff]
      %v328 = vld [vmem:[#allocation2 + $0x8] sm:$0xff]
      %v329 = vld [vmem:[#allocation2 + $0x10] sm:$0xff]
      %v330 = vld [vmem:[#allocation2 + $0x18] sm:$0xff]
      %v331 = vld [vmem:[#allocation2 + $0x20] sm:$0xff]
      %v332 = vld [vmem:[#allocation2 + $0x28] sm:$0xff]
      %v333 = vld [vmem:[%s2] sm:$0x7]
      %v335 = vlaneseq
      %v336 = vshrl.u32 %v335, 7
      %v337 = vsub.s32 0, %v336
      %v338 = vrot.slane %v333, %v337
      %v339 = vlaneseq
      %v340 = vshrl.u32 %v339, 7
      %v341 = vsub.s32 1, %v340
      %v342 = vrot.slane %v333, %v341
      %v343 = vlaneseq
      %v344 = vshrl.u32 %v343, 7
      %v345 = vsub.s32 2, %v344
      %v346 = vrot.slane %v333, %v345
      %v350 = vadd.f32 %v327, %v338
      %v351 = vadd.f32 %v328, %v342
      %v352 = vadd.f32 %v329, %v346
      %v353 = vadd.f32 %v330, %v338
      %v354 = vadd.f32 %v331, %v342
      %v355 = vadd.f32 %v332, %v346
      %v356 = vpack.c.bf16 %v353, %v350
      %v357 = vpack.c.bf16 %v354, %v351
      %v358 = vpack.c.bf16 %v355, %v352
      %v362 = vunpack.c.l.b16 %v356
      %v363 = vunpack.c.l.b16 %v357
      %v364 = vunpack.c.l.b16 %v358
      %v365 = vunpack.c.h.b16 %v356
      %v366 = vunpack.c.h.b16 %v357
      %v367 = vunpack.c.h.b16 %v358
      %v368 = vpack.c.b16 %v363, %v362
      %v369 = vpack.c.b16 %v364, %v364
      %v370 = vpack.c.b16 %v366, %v365
      %v371 = vpack.c.b16 %v367, %v367
      %376 = vst [vmem:[#allocation8] sm:$0xff] %v368
      %377 = vst [vmem:[#allocation8 + $0x8] sm:$0xf] %v369
      %378 = vst [vmem:[#allocation8 + $0xc] sm:$0xff] %v370
      %379 = vst [vmem:[#allocation8 + $0x14] sm:$0xf] %v371
    $region29: #{tpu_custom_call.1} parent=1 // pred_fallthru
      _
    // Predicated region
    $region30: #{tpu_custom_call.1} parent=1 // pred_check
      _
    $region31: #{tpu_custom_call.1} parent=1 // pred_check_branch
      %381 = sbr.rel (0) target = $region33
    $region32: #{tpu_custom_call.1} parent=1 // pred_region
      %s383 = ssub.s32 384, 384
      %384 = vsyncadd [#allocation5], %s383
      %s385 = sshll.u32 [#allocation8], 4
      %s386 = int_to_ptr.vmem [resolvable:$true] %s385
      %391 = dma.vmem_to_hbm [thread:$0]  %s386, 384, %s3, [#allocation5], 192, 192, 12
    $region33: #{tpu_custom_call.1} parent=1 // pred_fallthru
      _
    // Predicated region
    $region34: #{tpu_custom_call.1} parent=1 // pred_check
      _
    $region35: #{tpu_custom_call.1} parent=1 // pred_check_branch
      %393 = sbr.rel (0) target = $region37
    $region36: #{tpu_custom_call.1} parent=1 // pred_region
      %394 = dma.done [#allocation5], 384
    $region37: #{tpu_custom_call.1} parent=1 // pred_fallthru
      _
    %395 = vsyncpa [#allocation4], 1
    %396 = vsyncpa [#allocation7], 1
    %397 = vsyncpa [#allocation5], 1

</llo_original>
